<compile_context>
chip_gen: v7x
topology: tpu7x:2x2x1
jax: 0.10.0
libtpu: 0.0.40
codegen_flags: <defaults>
</compile_context>

<pallas_src>
import functools

import jax
import jax.numpy as jnp
from jax.experimental import pallas as pl
from jax.experimental.pallas import tpu as pltpu


def _dilated_residual_kernel(x_ref, halo_ref, w1_ref, b1_ref, w2_ref, b2_ref,
                             o_ref, *, dilation, kernel_size, left_pad,
                             seq_len, time_tile, mask_tail, compute_dtype):
    # x_ref    : (1, C, tT)          aligned time tile of x (original dtype)
    # halo_ref : (1, 1, C, (K-1)*d)  [left_pad cols before tile | right_ext after]
    # w1_ref   : (C, K*C)            fused dilated-conv weight (compute_dtype)
    # b1_ref   : (C, 1)  f32
    # w2_ref   : (C, C)              1x1-conv weight (compute_dtype)
    # b2_ref   : (C, 1)  f32
    # o_ref    : (1, C, tT)
    d = dilation
    K = kernel_size
    tT = time_tile
    halo_w = (K - 1) * d
    right_ext = halo_w - left_pad

    tile_in = x_ref[0]                                   # (C, tT), input dtype
    C = tile_in.shape[0]

    # Conv operand in compute dtype (bf16 by default; accumulation stays f32).
    tile_c = tile_in.astype(compute_dtype)
    if mask_tail:
        # Only the last time tile can overhang the sequence; out-of-range
        # input columns hold unspecified data, so zero them (== zero padding).
        limit = seq_len - pl.program_id(1) * tT
        col = jax.lax.broadcasted_iota(jnp.int32, (C, tT), 1)
        tile_c = jnp.where(col < limit, tile_c, jnp.zeros_like(tile_c))

    halo = halo_ref[0, 0].astype(compute_dtype)          # (C, halo_w)

    # tap(off)[:, t] == x[:, tile_start + t + off]   (zeros outside [0, T))
    if tT > halo_w:
        # Fast path: each tap is at most one concat of two pieces, and the
        # aligned tap (off == 0) needs no data movement at all.
        def tap(off):
            if off == 0:
                return tile_c
            if off < 0:
                return jnp.concatenate(
                    [halo[:, left_pad + off:left_pad], tile_c[:, :tT + off]],
                    axis=-1)
            return jnp.concatenate(
                [tile_c[:, off:], halo[:, left_pad:left_pad + off]], axis=-1)

        taps = jnp.concatenate([tap(k * d - left_pad) for k in range(K)],
                               axis=0)                   # (K*C, tT)
    else:
        # General fallback (tiny tiles / very large dilation): build the full
        # window then slice each tap out of it.
        pieces = []
        if left_pad > 0:
            pieces.append(halo[:, :left_pad])
        pieces.append(tile_c)
        if right_ext > 0:
            pieces.append(halo[:, left_pad:left_pad + right_ext])
        window = (jnp.concatenate(pieces, axis=-1)
                  if len(pieces) > 1 else pieces[0])
        taps = jnp.concatenate(
            [window[:, k * d:k * d + tT] for k in range(K)], axis=0)

    # Dilated K-tap conv fused into one deep-contraction MXU matmul.
    acc = jnp.dot(w1_ref[...], taps,
                  preferred_element_type=jnp.float32)    # (C, tT), f32
    hidden = jnp.maximum(acc + b1_ref[...], 0.0)         # bias + ReLU, f32

    out = jnp.dot(w2_ref[...], hidden.astype(compute_dtype),
                  preferred_element_type=jnp.float32) + b2_ref[...]

    # dropout == identity (eval mode); residual add in exact f32.
    o_ref[0] = (tile_in.astype(jnp.float32) + out).astype(o_ref.dtype)


def _pick_time_tile(T, C, kernel_size, compute_dtype, requested,
                    vmem_budget_bytes):
    """Largest lane-aligned time tile that fits the VMEM budget (<= 8192)."""
    if requested is None:
        cd = jnp.dtype(compute_dtype).itemsize
        # Per time column: double-buffered f32 in/out blocks + in-kernel
        # intermediates (tile_c, K taps, acc, hidden, conv2 out).
        per_col = C * (2 * (4 + 4) + (kernel_size + 2) * cd + 3 * 4)
        requested = vmem_budget_bytes // max(per_col, 1)
    tile = max(128, (requested // 128) * 128)
    tile = min(tile, 8192)
    return T if T <= tile else tile


def dilated_residual_layer(x_nct, w1_pt, b1, w2_pt, b2, *, dilation,
                           kernel_size=3, causal_conv=False,
                           compute_dtype=jnp.bfloat16, time_tile=None,
                           vmem_budget_bytes=24 * 1024 * 1024):
    """Forward pass of DilatedResidualLayer (eval-mode dropout).

    x_nct : (N, C, T) float32, PyTorch NCT layout
    w1_pt : (C_out, C_in, K)  conv_dilated.weight (PyTorch layout)
    b1    : (C_out,)
    w2_pt : (C_out, C_in, 1)  conv_1x1.weight
    b2    : (C_out,)
    returns (N, C, T)

    compute_dtype: dtype of the matmul operands (accumulation and the residual
    add are always f32).  Module is only self-consistent for kernel_size == 3.
    """
    N, C, T = x_nct.shape
    K = kernel_size
    d = dilation
    # Causal: PyTorch pads 2d both sides then drops the last 2d outputs, which
    # is equivalent to left-padding 2d only.  Non-causal: pad d each side.
    left_pad = d * (K - 1) if causal_conv else d
    halo_w = d * (K - 1)

    tT = _pick_time_tile(T, C, K, compute_dtype, time_tile, vmem_budget_bytes)
    J = pl.cdiv(T, tT)
    mask_tail = (T % tT) != 0

    # Halo side-array (N, J, C, halo_w): for tile j it holds the left_pad
    # columns just before the tile followed by the right_ext columns just
    # after it, zero-filled at the sequence boundaries.  One tiny gather.
    p = jnp.arange(halo_w, dtype=jnp.int32)
    offs = jnp.where(p < left_pad, p - left_pad, tT + (p - left_pad))
    idx = jnp.arange(J, dtype=jnp.int32)[:, None] * tT + offs[None, :]  # (J,hw)
    valid = (idx >= 0) & (idx < T)
    gathered = jnp.take(x_nct, jnp.clip(idx, 0, T - 1).reshape(-1), axis=2)
    gathered = gathered.reshape(N, C, J, halo_w).transpose(0, 2, 1, 3)
    halo = jnp.where(valid[None, :, None, :], gathered, 0)   # (N, J, C, hw)

    # Weights in matmul-friendly layout.
    # w1f[c_out, k*C + c_in] = w1_pt[c_out, c_in, k]  (matches tap stacking)
    w1f = jnp.transpose(w1_pt, (0, 2, 1)).reshape(C, K * C).astype(compute_dtype)
    w2m = w2_pt[:, :, 0].astype(compute_dtype)                # (C_out, C_in)
    b1c = b1.reshape(C, 1).astype(jnp.float32)
    b2c = b2.reshape(C, 1).astype(jnp.float32)

    kernel = functools.partial(
        _dilated_residual_kernel, dilation=d, kernel_size=K,
        left_pad=left_pad, seq_len=T, time_tile=tT, mask_tail=mask_tail,
        compute_dtype=compute_dtype)

    itemsize = x_nct.dtype.itemsize
    cost = pl.CostEstimate(
        flops=2 * N * T * C * C * (K + 1),
        transcendentals=0,
        bytes_accessed=(2 * N * C * T + N * J * C * halo_w) * itemsize
                       + (K + 1) * C * C * jnp.dtype(compute_dtype).itemsize)

    out = pl.pallas_call(
        kernel,
        out_shape=jax.ShapeDtypeStruct((N, C, T), x_nct.dtype),
        grid=(N, J),
        in_specs=[
            pl.BlockSpec((1, C, tT), lambda n, j: (n, 0, j)),            # x tile
            pl.BlockSpec((1, 1, C, halo_w), lambda n, j: (n, j, 0, 0)),  # halo
            pl.BlockSpec((C, K * C), lambda n, j: (0, 0)),               # w1 fused
            pl.BlockSpec((C, 1), lambda n, j: (0, 0)),                   # b1
            pl.BlockSpec((C, C), lambda n, j: (0, 0)),                   # w2
            pl.BlockSpec((C, 1), lambda n, j: (0, 0)),                   # b2
        ],
        out_specs=pl.BlockSpec((1, C, tT), lambda n, j: (n, 0, j)),
        compiler_params=pltpu.CompilerParams(
            dimension_semantics=("parallel", "parallel"),
            vmem_limit_bytes=32 * 1024 * 1024),
        cost_estimate=cost,
    )(x_nct, halo, w1f, b1c, w2m, b2c)
    return out


def _reference(x_nct, w1_pt, b1, w2_pt, b2, *, dilation, causal_conv=False):
    """Pure-JAX reference mirroring the PyTorch forward (eval mode)."""
    d = dilation
    K = w1_pt.shape[-1]
    pad = d * (K - 1) if causal_conv else d
    out = jax.lax.conv_general_dilated(
        x_nct, w1_pt, window_strides=(1,), padding=[(pad, pad)],
        rhs_dilation=(d,), dimension_numbers=("NCH", "OIH", "NCH"))
    out = out + b1[None, :, None]
    out = jnp.maximum(out, 0.0)
    if causal_conv:
        out = out[:, :, :-(d * (K - 1))]
    out = jax.lax.conv_general_dilated(
        out, w2_pt, window_strides=(1,), padding=[(0, 0)],
        dimension_numbers=("NCH", "OIH", "NCH"))
    out = out + b2[None, :, None]
    return x_nct + out


if __name__ == "__main__":
    kernel_size = 3
    key = jax.random.PRNGKey(0)

    def make_params(k, C):
        kw1, kb1, kw2, kb2 = jax.random.split(k, 4)
        # Deterministic PyTorch-style uniform init: U(-sqrt(1/fan_in), +).
        bound1 = (1.0 / (C * kernel_size)) ** 0.5
        w1_pt = jax.random.uniform(kw1, (C, C, kernel_size), jnp.float32,
                                   -bound1, bound1)
        b1 = jax.random.uniform(kb1, (C,), jnp.float32, -bound1, bound1)
        bound2 = (1.0 / C) ** 0.5
        w2_pt = jax.random.uniform(kw2, (C, C, 1), jnp.float32, -bound2, bound2)
        b2 = jax.random.uniform(kb2, (C,), jnp.float32, -bound2, bound2)
        return w1_pt, b1, w2_pt, b2

    cases = [
        # (N, C, T, time_tile, dilation, causal)
        (2, 8, 16, None, 2, False),    # single tile, non-causal
        (2, 8, 16, None, 3, True),     # single tile, causal
        (2, 8, 16, None, 10, True),    # halo wider than the tile (fallback)
        (2, 8, 300, 128, 4, False),    # multi-tile + ragged tail, non-causal
        (2, 8, 300, 128, 4, True),     # multi-tile + ragged tail, causal
    ]
    for i, (N, C, T, tt, dil, causal) in enumerate(cases):
        kx, kp = jax.random.split(jax.random.fold_in(key, i))
        x = jax.random.normal(kx, (N, C, T), jnp.float32)
        w1_pt, b1, w2_pt, b2 = make_params(kp, C)

        ref = _reference(x, w1_pt, b1, w2_pt, b2, dilation=dil,
                         causal_conv=causal)

        # f32 matmul operands: must match the f32 reference tightly.
        out_f32 = jax.block_until_ready(
            dilated_residual_layer(x, w1_pt, b1, w2_pt, b2, dilation=dil,
                                   kernel_size=kernel_size,
                                   causal_conv=causal,
                                   compute_dtype=jnp.float32, time_tile=tt))
        assert out_f32.shape == (N, C, T)
        assert jnp.allclose(out_f32, ref, atol=5e-5, rtol=5e-5), \
            f"f32 mismatch vs reference (case {i})"

        # bf16 matmul operands (production default): looser tolerance,
        # residual add stays exact f32.
        out_bf16 = jax.block_until_ready(
            dilated_residual_layer(x, w1_pt, b1, w2_pt, b2, dilation=dil,
                                   kernel_size=kernel_size,
                                   causal_conv=causal,
                                   compute_dtype=jnp.bfloat16, time_tile=tt))
        assert out_bf16.shape == (N, C, T)
        assert jnp.allclose(out_bf16, ref, atol=8e-2, rtol=5e-2), \
            f"bf16 mismatch vs reference (case {i})"

    print("KERNEL_OK")
</pallas_src>

<mosaic_0001>
module attributes {stable_mosaic.version = 11 : i64} {
  func.func @_dilated_residual_kernel(%arg0: i32, %arg1: i32, %arg2: memref<1x8x16xf32, #tpu.memory_space<vmem>>, %arg3: memref<1x1x8x4xf32, #tpu.memory_space<vmem>>, %arg4: memref<8x24xf32, #tpu.memory_space<vmem>>, %arg5: memref<8x1xf32, #tpu.memory_space<vmem>>, %arg6: memref<8x8xf32, #tpu.memory_space<vmem>>, %arg7: memref<8x1xf32, #tpu.memory_space<vmem>>, %arg8: memref<1x8x16xf32, #tpu.memory_space<vmem>>) attributes {dimension_semantics = [#tpu.dimension_semantics<parallel>, #tpu.dimension_semantics<parallel>], iteration_bounds = array<i64: 2, 1>, scalar_prefetch = 0 : i64, scratch_operands = 0 : i64, tpu.core_type = #tpu.core_type<tc>, window_params = [{transform_indices = @transform_0, window_bounds = array<i64: 1, 8, 16>}, {transform_indices = @transform_1, window_bounds = array<i64: 1, 1, 8, 4>}, {pipeline_mode = #tpu.pipeline_mode<synchronous>, transform_indices = @transform_2, window_bounds = array<i64: 8, 24>}, {pipeline_mode = #tpu.pipeline_mode<synchronous>, transform_indices = @transform_3, window_bounds = array<i64: 8, 1>}, {pipeline_mode = #tpu.pipeline_mode<synchronous>, transform_indices = @transform_4, window_bounds = array<i64: 8, 8>}, {pipeline_mode = #tpu.pipeline_mode<synchronous>, transform_indices = @transform_5, window_bounds = array<i64: 8, 1>}, {transform_indices = @transform_6, window_bounds = array<i64: 1, 8, 16>}]} {
    %c0 = arith.constant 0 : index
    %c0_0 = arith.constant 0 : index
    %c0_1 = arith.constant 0 : index
    %0 = vector.load %arg2[%c0, %c0_0, %c0_1] : memref<1x8x16xf32, #tpu.memory_space<vmem>>, vector<1x8x16xf32>
    %1 = vector.shape_cast %0 : vector<1x8x16xf32> to vector<8x16xf32>
    %c0_2 = arith.constant 0 : index
    %c0_3 = arith.constant 0 : index
    %c0_4 = arith.constant 0 : index
    %c0_5 = arith.constant 0 : index
    %2 = vector.load %arg3[%c0_2, %c0_3, %c0_4, %c0_5] : memref<1x1x8x4xf32, #tpu.memory_space<vmem>>, vector<1x1x8x4xf32>
    %3 = vector.shape_cast %2 : vector<1x1x8x4xf32> to vector<8x4xf32>
    %4 = vector.extract_strided_slice %3 {offsets = [0, 0], sizes = [8, 2], strides = [1, 1]} : vector<8x4xf32> to vector<8x2xf32>
    %5 = vector.extract_strided_slice %1 {offsets = [0, 0], sizes = [8, 14], strides = [1, 1]} : vector<8x16xf32> to vector<8x14xf32>
    %6 = tpu.concatenate %4, %5 in 1 : vector<8x2xf32>, vector<8x14xf32> -> vector<8x16xf32>
    %7 = vector.extract_strided_slice %1 {offsets = [0, 2], sizes = [8, 14], strides = [1, 1]} : vector<8x16xf32> to vector<8x14xf32>
    %8 = vector.extract_strided_slice %3 {offsets = [0, 2], sizes = [8, 2], strides = [1, 1]} : vector<8x4xf32> to vector<8x2xf32>
    %9 = tpu.concatenate %7, %8 in 1 : vector<8x14xf32>, vector<8x2xf32> -> vector<8x16xf32>
    %10 = tpu.concatenate %6, %1, %9 in 0 : vector<8x16xf32>, vector<8x16xf32>, vector<8x16xf32> -> vector<24x16xf32>
    %c0_6 = arith.constant 0 : index
    %c0_7 = arith.constant 0 : index
    %11 = vector.load %arg4[%c0_6, %c0_7] : memref<8x24xf32, #tpu.memory_space<vmem>>, vector<8x24xf32>
    %cst = arith.constant dense<0.000000e+00> : vector<8x16xf32>
    %12 = tpu.matmul %11, %10, %cst {dimension_numbers = #tpu.dot_dimension_numbers<[1], [0], [0], [1], [0, 0, 1, 1], [], []>} : vector<8x24xf32>, vector<24x16xf32>, vector<8x16xf32> -> vector<8x16xf32>
    %c0_8 = arith.constant 0 : index
    %c0_9 = arith.constant 0 : index
    %13 = vector.load %arg5[%c0_8, %c0_9] : memref<8x1xf32, #tpu.memory_space<vmem>>, vector<8x1xf32>
    %14 = vector.broadcast %13 : vector<8x1xf32> to vector<8x16xf32>
    %15 = arith.addf %12, %14 : vector<8x16xf32>
    %cst_10 = arith.constant 0.000000e+00 : f32
    %16 = vector.broadcast %cst_10 : f32 to vector<8x16xf32>
    %17 = arith.maximumf %15, %16 : vector<8x16xf32>
    %c0_11 = arith.constant 0 : index
    %c0_12 = arith.constant 0 : index
    %18 = vector.load %arg6[%c0_11, %c0_12] : memref<8x8xf32, #tpu.memory_space<vmem>>, vector<8x8xf32>
    %cst_13 = arith.constant dense<0.000000e+00> : vector<8x16xf32>
    %19 = tpu.matmul %18, %17, %cst_13 {dimension_numbers = #tpu.dot_dimension_numbers<[1], [0], [0], [1], [0, 0, 1, 1], [], []>} : vector<8x8xf32>, vector<8x16xf32>, vector<8x16xf32> -> vector<8x16xf32>
    %c0_14 = arith.constant 0 : index
    %c0_15 = arith.constant 0 : index
    %20 = vector.load %arg7[%c0_14, %c0_15] : memref<8x1xf32, #tpu.memory_space<vmem>>, vector<8x1xf32>
    %21 = vector.broadcast %20 : vector<8x1xf32> to vector<8x16xf32>
    %22 = arith.addf %19, %21 : vector<8x16xf32>
    %23 = arith.addf %1, %22 : vector<8x16xf32>
    %c0_16 = arith.constant 0 : index
    %c0_17 = arith.constant 0 : index
    %c0_18 = arith.constant 0 : index
    %24 = vector.load %arg8[%c0_16, %c0_17, %c0_18] : memref<1x8x16xf32, #tpu.memory_space<vmem>>, vector<1x8x16xf32>
    %25 = vector.shape_cast %24 : vector<1x8x16xf32> to vector<8x16xf32>
    %26 = vector.shape_cast %23 : vector<8x16xf32> to vector<1x8x16xf32>
    tpu.vector_store %arg8[%c0_16, %c0_17, %c0_18], %26 {strides = array<i32>} : memref<1x8x16xf32, #tpu.memory_space<vmem>>, vector<1x8x16xf32>,
    return
  }
  func.func @transform_0(%arg0: i32, %arg1: i32) -> (i32, i32, i32) {
    %c0_i32 = arith.constant 0 : i32
    %c0_i32_0 = arith.constant 0 : i32
    return %arg0, %c0_i32, %arg1 : i32, i32, i32
  }
  func.func @transform_1(%arg0: i32, %arg1: i32) -> (i32, i32, i32, i32) {
    %c0_i32 = arith.constant 0 : i32
    %c0_i32_0 = arith.constant 0 : i32
    %c0_i32_1 = arith.constant 0 : i32
    return %arg0, %arg1, %c0_i32, %c0_i32_0 : i32, i32, i32, i32
  }
  func.func @transform_2(%arg0: i32, %arg1: i32) -> (i32, i32) {
    %c0_i32 = arith.constant 0 : i32
    %c0_i32_0 = arith.constant 0 : i32
    %c0_i32_1 = arith.constant 0 : i32
    return %c0_i32, %c0_i32_0 : i32, i32
  }
  func.func @transform_3(%arg0: i32, %arg1: i32) -> (i32, i32) {
    %c0_i32 = arith.constant 0 : i32
    %c0_i32_0 = arith.constant 0 : i32
    %c0_i32_1 = arith.constant 0 : i32
    return %c0_i32, %c0_i32_0 : i32, i32
  }
  func.func @transform_4(%arg0: i32, %arg1: i32) -> (i32, i32) {
    %c0_i32 = arith.constant 0 : i32
    %c0_i32_0 = arith.constant 0 : i32
    %c0_i32_1 = arith.constant 0 : i32
    return %c0_i32, %c0_i32_0 : i32, i32
  }
  func.func @transform_5(%arg0: i32, %arg1: i32) -> (i32, i32) {
    %c0_i32 = arith.constant 0 : i32
    %c0_i32_0 = arith.constant 0 : i32
    %c0_i32_1 = arith.constant 0 : i32
    return %c0_i32, %c0_i32_0 : i32, i32
  }
  func.func @transform_6(%arg0: i32, %arg1: i32) -> (i32, i32, i32) {
    %c0_i32 = arith.constant 0 : i32
    %c0_i32_0 = arith.constant 0 : i32
    return %arg0, %c0_i32, %arg1 : i32, i32, i32
  }
}

</mosaic_0001>

<llo_original>
// kernel: tpu_custom_call.1
$region0: #{tpu_custom_call.1}
  #allocation0 [shape = 'u32[]', space=smem, size = 0x4, offset = 0x4, fixed_abs, tag = 'smem constant byte address 0x4 - core index']
  #allocation1 [shape = 'u32[144,128]{1,0:T(1,128)}', space=vmem, size = 0x12000, scoped, tag = 'internal scratch']
  %s0 = inlined_call_operand.vmem [shape: f32[2,8,16], index: 0, kind: input, shape index: {}]
  %s1 = inlined_call_operand.vmem [shape: f32[2,1,8,4], index: 1, kind: input, shape index: {}]
  %s2 = inlined_call_operand.vmem [shape: f32[8,24], index: 2, kind: input, shape index: {}]
  %s3 = inlined_call_operand.vmem [shape: f32[8,1], index: 3, kind: input, shape index: {}]
  %s4 = inlined_call_operand.vmem [shape: f32[8,8], index: 4, kind: input, shape index: {}]
  %s5 = inlined_call_operand.vmem [shape: f32[8,1], index: 5, kind: input, shape index: {}]
  %s6 = inlined_call_operand.hbm [shape: f32[2,8,16], index: 6, kind: output, shape index: {}]
  %s7 = sld [smem:[#allocation0]]
  $region57: #{tpu_custom_call.1} parent=0
    _
  %s9 = ssub.s32 1, %s7
  %s10 = scalar_select 0, %s9, %s7
  $region1: #{tpu_custom_call.1} parent=0
    #allocation2 [shape = 'u8[8192]{0}', space=vmem, size = 0x2000, scoped, tag = 'output window, operand 0']
    #allocation3 [shape = 's32[2]{0}', space=sflag, size = 0x8, scoped, tag = 'scoped memory for tpu_custom_call.1']
    %11 = vsyncpa [#allocation3], 0
    %s12 = scalar_lea.sflag [#allocation3], 1
    %13 = vsyncpa %s12, 0
    loop: start=0, step=1, limit=4
    $region2: #{tpu_custom_call.1} parent=1 // loop_pre_header
      _
    $region3: #{tpu_custom_call.1} parent=1 // loop_header
      %s15 = sphi 0, %s19
      %p16 = scmp.ge.s32.totalorder %s15, 4
      %s22 = sphi 0, %s34
      %s23 = sphi 0, %s30
      %s24 = sphi 0, %s22
      %s25 = sphi 0, %s23
      %s26 = sphi 0, %s24
      %s27 = sphi 0, %s25
      %s39 = sphi 0, %s41
      %s42 = sphi 0, %s39
      %s43 = sphi 0, %s42
      %s59 = sphi 0, %s43
      %s67 = sphi 0, %s69
      %s70 = sphi 0, %s67
      %s71 = sphi 0, %s70
      %s87 = sphi 0, %s71
      %s91 = sphi 0, %s91
      %s93 = sphi 0, %s91
      %s94 = sphi 0, %s93
      %s108 = sphi 0, %s94
      %s112 = sphi 0, %s112
      %s114 = sphi 0, %s112
      %s115 = sphi 0, %s114
      %s129 = sphi 0, %s115
      %s133 = sphi 0, %s133
      %s135 = sphi 0, %s133
      %s136 = sphi 0, %s135
      %s150 = sphi 0, %s136
      %s154 = sphi 0, %s154
      %s156 = sphi 0, %s154
      %s157 = sphi 0, %s156
      %s171 = sphi 0, %s157
      %s179 = sphi 0, %s181
      %s182 = sphi 0, %s179
      %s183 = sphi 0, %s182
      %s199 = sphi 0, %s183
    $region4: #{tpu_custom_call.1} parent=1 // loop_header_branch
      %18 = sbr.rel (%p16) target = $region8
    $region5: #{tpu_custom_call.1} parent=1 // loop_body
      %s20 = ssub.s32 %s15, 1
      %s21 = ssub.s32 %s15, 2
      %s28 = sadd.s32 1, %s23
      %p29 = scmp.ge.s32.totalorder %s28, 1
      %s30 = scalar_select %p29, 0, %s28
      %s31 = sadd.s32 1, %s22
      %s32 = scalar_select %p29, %s31, %s22
      %p33 = scmp.ge.s32.totalorder %s32, 2
      %s34 = scalar_select %p33, 0, %s32
      %s35 = ssub.s32 %s22, %s34
      %s36 = ssub.s32 %s23, %s30
      %s37 = sor.u32 %s35, %s36
      %p38 = scmp.eq.s32.totalorder %s37, 0
      %s40 = sadd.s32 %s39, 1
      %s41 = scalar_select %p38, %s39, %s40
      %p44 = pneg %p38
      %p45 = scmp.eq.s32.totalorder %s15, 1
      %p46 = por %p44, %p45
      %p47 = scmp.ne.s32.totalorder %s39, %s42
      %p48 = scmp.eq.s32.totalorder %s15, 0
      %p49 = por %p47, %p48
      %p50 = scmp.ne.s32.totalorder %s39, %s42
      %p51 = scmp.eq.s32.totalorder %s20, 1
      %p52 = por %p50, %p51
      %p53 = scmp.ne.s32.totalorder %s42, %s43
      %p54 = scmp.eq.s32.totalorder %s20, 0
      %p55 = por %p53, %p54
      %p56 = scmp.ne.s32.totalorder %s42, %s43
      %p57 = scmp.eq.s32.totalorder %s21, 1
      %p58 = por %p56, %p57
      %p60 = scmp.ne.s32.totalorder %s43, %s59
      %p61 = scmp.eq.s32.totalorder %s21, 0
      %p62 = por %p60, %p61
      %s63 = ssub.s32 %s22, %s34
      %s64 = ssub.s32 %s23, %s30
      %s65 = sor.u32 %s63, %s64
      %p66 = scmp.eq.s32.totalorder %s65, 0
      %s68 = sadd.s32 %s67, 1
      %s69 = scalar_select %p66, %s67, %s68
      %p72 = pneg %p66
      %p73 = scmp.eq.s32.totalorder %s15, 1
      %p74 = por %p72, %p73
      %p75 = scmp.ne.s32.totalorder %s67, %s70
      %p76 = scmp.eq.s32.totalorder %s15, 0
      %p77 = por %p75, %p76
      %p78 = scmp.ne.s32.totalorder %s67, %s70
      %p79 = scmp.eq.s32.totalorder %s20, 1
      %p80 = por %p78, %p79
      %p81 = scmp.ne.s32.totalorder %s70, %s71
      %p82 = scmp.eq.s32.totalorder %s20, 0
      %p83 = por %p81, %p82
      %p84 = scmp.ne.s32.totalorder %s70, %s71
      %p85 = scmp.eq.s32.totalorder %s21, 1
      %p86 = por %p84, %p85
      %p88 = scmp.ne.s32.totalorder %s71, %s87
      %p89 = scmp.eq.s32.totalorder %s21, 0
      %p90 = por %p88, %p89
      %s92 = sadd.s32 %s91, 1
      %p95 = scmp.eq.s32.totalorder %s15, 1
      %p96 = scmp.ne.s32.totalorder %s91, %s93
      %p97 = scmp.eq.s32.totalorder %s15, 0
      %p98 = por %p96, %p97
      %p99 = scmp.ne.s32.totalorder %s91, %s93
      %p100 = scmp.eq.s32.totalorder %s20, 1
      %p101 = por %p99, %p100
      %p102 = scmp.ne.s32.totalorder %s93, %s94
      %p103 = scmp.eq.s32.totalorder %s20, 0
      %p104 = por %p102, %p103
      %p105 = scmp.ne.s32.totalorder %s93, %s94
      %p106 = scmp.eq.s32.totalorder %s21, 1
      %p107 = por %p105, %p106
      %p109 = scmp.ne.s32.totalorder %s94, %s108
      %p110 = scmp.eq.s32.totalorder %s21, 0
      %p111 = por %p109, %p110
      %s113 = sadd.s32 %s112, 1
      %p116 = scmp.eq.s32.totalorder %s15, 1
      %p117 = scmp.ne.s32.totalorder %s112, %s114
      %p118 = scmp.eq.s32.totalorder %s15, 0
      %p119 = por %p117, %p118
      %p120 = scmp.ne.s32.totalorder %s112, %s114
      %p121 = scmp.eq.s32.totalorder %s20, 1
      %p122 = por %p120, %p121
      %p123 = scmp.ne.s32.totalorder %s114, %s115
      %p124 = scmp.eq.s32.totalorder %s20, 0
      %p125 = por %p123, %p124
      %p126 = scmp.ne.s32.totalorder %s114, %s115
      %p127 = scmp.eq.s32.totalorder %s21, 1
      %p128 = por %p126, %p127
      %p130 = scmp.ne.s32.totalorder %s115, %s129
      %p131 = scmp.eq.s32.totalorder %s21, 0
      %p132 = por %p130, %p131
      %s134 = sadd.s32 %s133, 1
      %p137 = scmp.eq.s32.totalorder %s15, 1
      %p138 = scmp.ne.s32.totalorder %s133, %s135
      %p139 = scmp.eq.s32.totalorder %s15, 0
      %p140 = por %p138, %p139
      %p141 = scmp.ne.s32.totalorder %s133, %s135
      %p142 = scmp.eq.s32.totalorder %s20, 1
      %p143 = por %p141, %p142
      %p144 = scmp.ne.s32.totalorder %s135, %s136
      %p145 = scmp.eq.s32.totalorder %s20, 0
      %p146 = por %p144, %p145
      %p147 = scmp.ne.s32.totalorder %s135, %s136
      %p148 = scmp.eq.s32.totalorder %s21, 1
      %p149 = por %p147, %p148
      %p151 = scmp.ne.s32.totalorder %s136, %s150
      %p152 = scmp.eq.s32.totalorder %s21, 0
      %p153 = por %p151, %p152
      %s155 = sadd.s32 %s154, 1
      %p158 = scmp.eq.s32.totalorder %s15, 1
      %p159 = scmp.ne.s32.totalorder %s154, %s156
      %p160 = scmp.eq.s32.totalorder %s15, 0
      %p161 = por %p159, %p160
      %p162 = scmp.ne.s32.totalorder %s154, %s156
      %p163 = scmp.eq.s32.totalorder %s20, 1
      %p164 = por %p162, %p163
      %p165 = scmp.ne.s32.totalorder %s156, %s157
      %p166 = scmp.eq.s32.totalorder %s20, 0
      %p167 = por %p165, %p166
      %p168 = scmp.ne.s32.totalorder %s156, %s157
      %p169 = scmp.eq.s32.totalorder %s21, 1
      %p170 = por %p168, %p169
      %p172 = scmp.ne.s32.totalorder %s157, %s171
      %p173 = scmp.eq.s32.totalorder %s21, 0
      %p174 = por %p172, %p173
      %s175 = ssub.s32 %s22, %s34
      %s176 = ssub.s32 %s23, %s30
      %s177 = sor.u32 %s175, %s176
      %p178 = scmp.eq.s32.totalorder %s177, 0
      %s180 = sadd.s32 %s179, 1
      %s181 = scalar_select %p178, %s179, %s180
      %p184 = pneg %p178
      %p185 = scmp.eq.s32.totalorder %s15, 1
      %p186 = por %p184, %p185
      %p187 = scmp.ne.s32.totalorder %s179, %s182
      %p188 = scmp.eq.s32.totalorder %s15, 0
      %p189 = por %p187, %p188
      %p190 = scmp.ne.s32.totalorder %s179, %s182
      %p191 = scmp.eq.s32.totalorder %s20, 1
      %p192 = por %p190, %p191
      %p193 = scmp.ne.s32.totalorder %s182, %s183
      %p194 = scmp.eq.s32.totalorder %s20, 0
      %p195 = por %p193, %p194
      %p196 = scmp.ne.s32.totalorder %s182, %s183
      %p197 = scmp.eq.s32.totalorder %s21, 1
      %p198 = por %p196, %p197
      %p200 = scmp.ne.s32.totalorder %s183, %s199
      %p201 = scmp.eq.s32.totalorder %s21, 0
      %p202 = por %p200, %p201
      %p203 = scmp.le.s32.totalorder 1, %s15
      %p204 = scmp.lt.s32.totalorder %s15, 3
      %p205 = pnand %p203, %p204
      %p206 = pneg %p205
      // Predicated region
      $region9: #{tpu_custom_call.1} parent=5 // pred_check
        _
      $region10: #{tpu_custom_call.1} parent=5 // pred_check_branch
        %208 = sbr.rel (%p205) target = $region12
      $region11: #{tpu_custom_call.1} parent=5 // pred_region
        %s209 = ssub.s32 %s15, 1
        // Predicated region
        $region13: #{tpu_custom_call.1} parent=11 // pred_check
          %p210 = pneg %p104
        $region14: #{tpu_custom_call.1} parent=11 // pred_check_branch
          %212 = sbr.rel (%p210) target = $region16
        $region15: #{tpu_custom_call.1} parent=11 // pred_region
          _
        $region16: #{tpu_custom_call.1} parent=11 // pred_fallthru
          _
        // Predicated region
        $region17: #{tpu_custom_call.1} parent=11 // pred_check
          %p213 = pneg %p125
        $region18: #{tpu_custom_call.1} parent=11 // pred_check_branch
          %215 = sbr.rel (%p213) target = $region20
        $region19: #{tpu_custom_call.1} parent=11 // pred_region
          _
        $region20: #{tpu_custom_call.1} parent=11 // pred_fallthru
          _
        // Predicated region
        $region21: #{tpu_custom_call.1} parent=11 // pred_check
          %p216 = pneg %p146
        $region22: #{tpu_custom_call.1} parent=11 // pred_check_branch
          %218 = sbr.rel (%p216) target = $region24
        $region23: #{tpu_custom_call.1} parent=11 // pred_region
          _
        $region24: #{tpu_custom_call.1} parent=11 // pred_fallthru
          _
        // Predicated region
        $region25: #{tpu_custom_call.1} parent=11 // pred_check
          %p219 = pneg %p167
        $region26: #{tpu_custom_call.1} parent=11 // pred_check_branch
          %221 = sbr.rel (%p219) target = $region28
        $region27: #{tpu_custom_call.1} parent=11 // pred_region
          _
        $region28: #{tpu_custom_call.1} parent=11 // pred_fallthru
          _
      $region12: #{tpu_custom_call.1} parent=5 // pred_fallthru
        _
      %p222 = scmp.lt.s32.totalorder %s15, 2
      // Predicated region
      $region29: #{tpu_custom_call.1} parent=5 // pred_check
        %p223 = pneg %p222
      $region30: #{tpu_custom_call.1} parent=5 // pred_check_branch
        %225 = sbr.rel (%p223) target = $region32
      $region31: #{tpu_custom_call.1} parent=5 // pred_region
        // Predicated region
        $region33: #{tpu_custom_call.1} parent=31 // pred_check
          %p226 = pneg %p49
        $region34: #{tpu_custom_call.1} parent=31 // pred_check_branch
          %228 = sbr.rel (%p226) target = $region36
        $region35: #{tpu_custom_call.1} parent=31 // pred_region
          %p229 = scmp.lt.s32.totalorder %s22, 1
          %s230 = scalar_select %p229, %s22, 1
          %p231 = scmp.lt.s32.totalorder %s23, 0
          %s232 = scalar_select %p231, %s23, 0
          %s233 = sadd.s32 %s232, %s230
          %s234 = smul.addr %s233, 8
          %s235 = scalar_lea.vmem %s0, %s234
        $region36: #{tpu_custom_call.1} parent=31 // pred_fallthru
          _
        // Predicated region
        $region37: #{tpu_custom_call.1} parent=31 // pred_check
          %p236 = pneg %p77
        $region38: #{tpu_custom_call.1} parent=31 // pred_check_branch
          %238 = sbr.rel (%p236) target = $region40
        $region39: #{tpu_custom_call.1} parent=31 // pred_region
          %p239 = scmp.lt.s32.totalorder %s22, 1
          %s240 = scalar_select %p239, %s22, 1
          %p241 = scmp.lt.s32.totalorder %s23, 0
          %s242 = scalar_select %p241, %s23, 0
          %s243 = sadd.s32 %s242, %s240
          %s244 = smul.addr %s243, 8
          %s245 = scalar_lea.vmem %s1, %s244
        $region40: #{tpu_custom_call.1} parent=31 // pred_fallthru
          _
      $region32: #{tpu_custom_call.1} parent=5 // pred_fallthru
        _
      %p246 = scmp.le.s32.totalorder 1, %s15
      %p247 = scmp.lt.s32.totalorder %s15, 3
      %p248 = pnand %p246, %p247
      %p249 = pneg %p248
      // Predicated region
      $region41: #{tpu_custom_call.1} parent=5 // pred_check
        _
      $region42: #{tpu_custom_call.1} parent=5 // pred_check_branch
        %251 = sbr.rel (%p248) target = $region44
      $region43: #{tpu_custom_call.1} parent=5 // pred_region
        %s252 = ssub.s32 %s15, 1
        %p253 = scmp.lt.s32.totalorder %s24, 1
        %s254 = scalar_select %p253, %s24, 1
        %p255 = scmp.lt.s32.totalorder %s25, 0
        %s256 = scalar_select %p255, %s25, 0
        %s257 = sadd.s32 %s256, %s254
        %s258 = smul.addr %s257, 8
        %s259 = scalar_lea.vmem %s0, %s258
        %p260 = pneg %p55
        %p261 = pneg %p52
        %p262 = scmp.lt.s32.totalorder %s24, 1
        %s263 = scalar_select %p262, %s24, 1
        %p264 = scmp.lt.s32.totalorder %s25, 0
        %s265 = scalar_select %p264, %s25, 0
        %s266 = sadd.s32 %s265, %s263
        %s267 = smul.addr %s266, 8
        %s268 = scalar_lea.vmem %s1, %s267
        %p269 = pneg %p83
        %p270 = pneg %p80
        %p271 = pneg %p104
        %p272 = pneg %p101
        %p273 = pneg %p125
        %p274 = pneg %p122
        %p275 = pneg %p146
        %p276 = pneg %p143
        %p277 = pneg %p167
        %p278 = pneg %p164
        %p279 = pneg %p195
        %p280 = pneg %p192
        %s281 = sand.u32 %s182, 1
        %s282 = scalar_lea.sflag [#allocation3], %s281
        %s283 = sand.u32 %s182, 1
        %s284 = smul.addr %s283, 8
        %s285 = scalar_lea.vmem [#allocation2], %s284
        %p286 = scmp.lt.s32.totalorder %s24, 1
        %s287 = scalar_select %p286, %s24, 1
        %p288 = scmp.lt.s32.totalorder %s25, 0
        %s289 = scalar_select %p288, %s25, 0
        %s290 = sadd.s32 %s289, %s287
        %s291 = smul.addr %s290, 8
        %s292 = scalar_lea.vmem %s0, %s291
        %p293 = scmp.lt.s32.totalorder %s24, 1
        %s294 = scalar_select %p293, %s24, 1
        %p295 = scmp.lt.s32.totalorder %s25, 0
        %s296 = scalar_select %p295, %s25, 0
        %s297 = sadd.s32 %s296, %s294
        %s298 = smul.addr %s297, 8
        %s299 = scalar_lea.vmem %s1, %s298
        %v300 = vld [vmem:[%s292] sm:$0xff]
        %v301 = vld [vmem:[%s299] sm:$0xff]
        %303 = vrot.lane.b32.xlu0 %v300, 2
        %v304 = vpop.permute.xlu0 %303
        %vm306 = vcmask 15360
        %v307 = vsel %vm306, %v301, %v304
        %308 = vrot.lane.b32.xlu0 %v300, 126
        %v309 = vpop.permute.xlu0 %308
        %312 = vrot.lane.b32.xlu0 %v301, 12
        %v313 = vpop.permute.xlu0 %312
        %vm315 = vcmask 113664
        %v316 = vsel %vm315, %v309, %v313
        %v317 = vld [vmem:[%s2] sm:$0xff]
        %v318 = vld [vmem:[%s3] sm:$0xff]
        %320 = vset.pattern.permute.xlu0 0
        %321 = vperm.xlu0 %320, %v318
        %v322 = vpop.permute.xlu0 %321
        %vm324 = vcmask 195584
        %v326 = vsel %vm324, %v317, 0
        %328 = vmatprep.subr.mxu0 0.0
        %329 = vmatpush1.msra.mxu0 %v307
        %330 = vmatprep.subr.mxu0 0.0
        %331 = vmatpush1.msra.mxu0 %v300
        %332 = vmatprep.subr.mxu0 0.0
        %333 = vmatpush1.msra.mxu0 %v316
        %334 = vmatprep.subr.mxu0 0.0
        %335 = vmatpush1.msra.mxu0 0.0
        %336 = vmatprep.subr.mxu0 0.0
        %337 = vmatpush1.msra.mxu0 0.0
        %338 = vmatprep.subr.mxu0 0.0
        %339 = vmatpush1.msra.mxu0 0.0
        %340 = vmatprep.subr.mxu0 0.0
        %341 = vmatpush1.msra.mxu0 0.0
        %342 = vmatprep.subr.mxu0 0.0
        %343 = vmatpush1.msra.mxu0 0.0
        %344 = vmatprep.subr.mxu0 0.0
        %345 = vmatpush1.msra.mxu0 0.0
        %346 = vmatprep.subr.mxu0 0.0
        %347 = vmatpush1.msra.mxu0 0.0
        %348 = vmatprep.subr.mxu0 0.0
        %349 = vmatpush1.msra.mxu0 0.0
        %350 = vmatprep.subr.mxu0 0.0
        %351 = vmatpush1.msra.mxu0 0.0
        %352 = vmatprep.subr.mxu0 0.0
        %353 = vmatpush1.msra.mxu0 0.0
        %354 = vmatprep.subr.mxu0 0.0
        %355 = vmatpush1.msra.mxu0 0.0
        %356 = vmatprep.subr.mxu0 0.0
        %357 = vmatpush1.msra.mxu0 0.0
        %358 = vmatprep.subr.mxu0 0.0
        %359 = vmatpush1.msra.mxu0 0.0
        %360 = vmatprep.subr.mxu0 0.0
        %361 = vmatpush1.msra.mxu0 0.0
        %362 = vmatprep.subr.mxu0 0.0
        %363 = vmatpush1.msra.mxu0 0.0
        %364 = vmatprep.subr.mxu0 0.0
        %365 = vmatpush1.msra.mxu0 0.0
        %366 = vmatprep.subr.mxu0 0.0
        %367 = vmatpush1.msra.mxu0 0.0
        %368 = vmatprep.subr.mxu0 0.0
        %369 = vmatpush1.msra.mxu0 0.0
        %370 = vmatprep.subr.mxu0 0.0
        %371 = vmatpush1.msra.mxu0 0.0
        %372 = vmatprep.subr.mxu0 0.0
        %373 = vmatpush1.msra.mxu0 0.0
        %374 = vmatprep.subr.mxu0 0.0
        %375 = vmatpush1.msra.mxu0 0.0
        %376 = vmatprep.subr.mxu0 0.0
        %377 = vmatpush1.msra.mxu0 0.0
        %378 = vmatprep.subr.mxu0 0.0
        %379 = vmatpush1.msra.mxu0 0.0
        %380 = vmatprep.subr.mxu0 0.0
        %381 = vmatpush1.msra.mxu0 0.0
        %382 = vmatprep.subr.mxu0 0.0
        %383 = vmatpush1.msra.mxu0 0.0
        %384 = vmatprep.subr.mxu0 0.0
        %385 = vmatpush1.msra.mxu0 0.0
        %386 = vmatprep.subr.mxu0 0.0
        %387 = vmatpush1.msra.mxu0 0.0
        %388 = vmatprep.subr.mxu0 0.0
        %389 = vmatpush1.msra.mxu0 0.0
        %390 = vmatprep.subr.mxu0 0.0
        %391 = vmatpush1.msra.mxu0 0.0
        %392 = vmatprep.mubr.f32.mxu0 0.0
        %393 = vmatmul.mubr.f32.gmra.mrb[0].mxu0 %v326
        %v394 = vpop.f32.mrb[0].mxu0
        %v395 = vadd.f32 %v322, %v394
        %v396 = vpop.f32.mrb[0].mxu0
        %397 = vdwg.mxu0
        %v398 = vmax.f32 %v395, 0.0
        %v399 = vld [vmem:[%s4] sm:$0xff]
        %v400 = vld [vmem:[%s5] sm:$0xff]
        %402 = vset.pattern.permute.xlu0 0
        %403 = vperm.xlu0 %402, %v400
        %v404 = vpop.permute.xlu0 %403
        %vm406 = vcmask 64512
        %v408 = vsel %vm406, %v399, 0
        %410 = vmatprep.subr.mxu0 0.0
        %411 = vmatpush1.msra.mxu0 %v398
        %412 = vmatprep.subr.mxu0 0.0
        %413 = vmatpush1.msra.mxu0 0.0
        %414 = vmatprep.subr.mxu0 0.0
        %415 = vmatpush1.msra.mxu0 0.0
        %416 = vmatprep.subr.mxu0 0.0
        %417 = vmatpush1.msra.mxu0 0.0
        %418 = vmatprep.subr.mxu0 0.0
        %419 = vmatpush1.msra.mxu0 0.0
        %420 = vmatprep.subr.mxu0 0.0
        %421 = vmatpush1.msra.mxu0 0.0
        %422 = vmatprep.subr.mxu0 0.0
        %423 = vmatpush1.msra.mxu0 0.0
        %424 = vmatprep.subr.mxu0 0.0
        %425 = vmatpush1.msra.mxu0 0.0
        %426 = vmatprep.subr.mxu0 0.0
        %427 = vmatpush1.msra.mxu0 0.0
        %428 = vmatprep.subr.mxu0 0.0
        %429 = vmatpush1.msra.mxu0 0.0
        %430 = vmatprep.subr.mxu0 0.0
        %431 = vmatpush1.msra.mxu0 0.0
        %432 = vmatprep.subr.mxu0 0.0
        %433 = vmatpush1.msra.mxu0 0.0
        %434 = vmatprep.subr.mxu0 0.0
        %435 = vmatpush1.msra.mxu0 0.0
        %436 = vmatprep.subr.mxu0 0.0
        %437 = vmatpush1.msra.mxu0 0.0
        %438 = vmatprep.subr.mxu0 0.0
        %439 = vmatpush1.msra.mxu0 0.0
        %440 = vmatprep.subr.mxu0 0.0
        %441 = vmatpush1.msra.mxu0 0.0
        %442 = vmatprep.subr.mxu0 0.0
        %443 = vmatpush1.msra.mxu0 0.0
        %444 = vmatprep.subr.mxu0 0.0
        %445 = vmatpush1.msra.mxu0 0.0
        %446 = vmatprep.subr.mxu0 0.0
        %447 = vmatpush1.msra.mxu0 0.0
        %448 = vmatprep.subr.mxu0 0.0
        %449 = vmatpush1.msra.mxu0 0.0
        %450 = vmatprep.subr.mxu0 0.0
        %451 = vmatpush1.msra.mxu0 0.0
        %452 = vmatprep.subr.mxu0 0.0
        %453 = vmatpush1.msra.mxu0 0.0
        %454 = vmatprep.subr.mxu0 0.0
        %455 = vmatpush1.msra.mxu0 0.0
        %456 = vmatprep.subr.mxu0 0.0
        %457 = vmatpush1.msra.mxu0 0.0
        %458 = vmatprep.subr.mxu0 0.0
        %459 = vmatpush1.msra.mxu0 0.0
        %460 = vmatprep.subr.mxu0 0.0
        %461 = vmatpush1.msra.mxu0 0.0
        %462 = vmatprep.subr.mxu0 0.0
        %463 = vmatpush1.msra.mxu0 0.0
        %464 = vmatprep.subr.mxu0 0.0
        %465 = vmatpush1.msra.mxu0 0.0
        %466 = vmatprep.subr.mxu0 0.0
        %467 = vmatpush1.msra.mxu0 0.0
        %468 = vmatprep.subr.mxu0 0.0
        %469 = vmatpush1.msra.mxu0 0.0
        %470 = vmatprep.subr.mxu0 0.0
        %471 = vmatpush1.msra.mxu0 0.0
        %472 = vmatprep.subr.mxu0 0.0
        %473 = vmatpush1.msra.mxu0 0.0
        %474 = vmatprep.mubr.f32.mxu0 0.0
        %475 = vmatmul.mubr.f32.gmra.mrb[0].mxu0 %v408
        %v476 = vpop.f32.mrb[0].mxu0
        %v477 = vadd.f32 %v404, %v476
        %v478 = vpop.f32.mrb[0].mxu0
        %479 = vdwg.mxu0
        %v480 = vadd.f32 %v300, %v477
        %vm481 = vcmask 130048
        %482 = vst.msk [vmem:[%s285] sm:$0xff] %vm481, %v480
        %s483 = sand.u32 %s182, 1
        %s484 = scalar_lea.sflag [#allocation3], %s483
        %s485 = sand.u32 %s182, 1
        %s486 = smul.addr %s485, 8
        %s487 = scalar_lea.vmem [#allocation2], %s486
        // Predicated region
        $region45: #{tpu_custom_call.1} parent=43 // pred_check
          %p488 = pneg %p192
        $region46: #{tpu_custom_call.1} parent=43 // pred_check_branch
          %490 = sbr.rel (%p488) target = $region48
        $region47: #{tpu_custom_call.1} parent=43 // pred_region
          %s492 = ssub.s32 128, 128
          %493 = vsyncadd %s484, %s492
          %s494 = sadd.s32 %s25, %s24
          %s495 = smul.addr %s494, 128
          %s496 = scalar_lea.hbm %s6, %s495
          %s498 = sshll.u32 %s487, 4
          %s499 = int_to_ptr.vmem [resolvable:$true] %s498
          %501 = dma.vmem_to_hbm [thread:$0]  %s499, 128, %s496, %s484
        $region48: #{tpu_custom_call.1} parent=43 // pred_fallthru
          _
      $region44: #{tpu_custom_call.1} parent=5 // pred_fallthru
        _
      %p502 = scmp.le.s32.totalorder 2, %s15
      // Predicated region
      $region49: #{tpu_custom_call.1} parent=5 // pred_check
        %p503 = pneg %p502
      $region50: #{tpu_custom_call.1} parent=5 // pred_check_branch
        %505 = sbr.rel (%p503) target = $region52
      $region51: #{tpu_custom_call.1} parent=5 // pred_region
        %s506 = ssub.s32 %s15, 2
        // Predicated region
        $region53: #{tpu_custom_call.1} parent=51 // pred_check
          %p507 = pneg %p198
        $region54: #{tpu_custom_call.1} parent=51 // pred_check_branch
          %509 = sbr.rel (%p507) target = $region56
        $region55: #{tpu_custom_call.1} parent=51 // pred_region
          %s510 = sand.u32 %s183, 1
          %s511 = scalar_lea.sflag [#allocation3], %s510
          %s512 = sand.u32 %s183, 1
          %s513 = smul.addr %s512, 8
          %s514 = scalar_lea.vmem [#allocation2], %s513
          %515 = dma.done %s511, 128
        $region56: #{tpu_custom_call.1} parent=51 // pred_fallthru
          _
      $region52: #{tpu_custom_call.1} parent=5 // pred_fallthru
        _
    $region6: #{tpu_custom_call.1} parent=1 // loop_footer
      %s19 = sadd.s32 1, %s15
    $region7: #{tpu_custom_call.1} parent=1 // loop_footer_branch
      %14 = sbr.rel target = $region3
    $region8: #{tpu_custom_call.1} parent=1 // loop_exit
      _
    %516 = vsyncpa [#allocation3], 1
    %s517 = scalar_lea.sflag [#allocation3], 1
    %518 = vsyncpa %s517, 1

</llo_original>
